<compile_context>
chip_gen: v6e
topology: v6e:2x2x1
jax: 0.10.0
libtpu: 0.0.40
codegen_flags: <defaults>
</compile_context>

<pallas_src>
import functools

import numpy as np
import jax
import jax.numpy as jnp
from jax.experimental import pallas as pl
from jax.experimental.pallas import tpu as pltpu


# ----------------------------------------------------------------------------
# Parameter construction (mirrors gamma_cnn.make_cnn_gamma / __init__ exactly)
# ----------------------------------------------------------------------------
def make_cnn_gamma(hidden_channels: int, input_channels: int, gamma: float):
    """Returns (weights2, biases) exactly as the PyTorch module builds them.

    weights2: (C, K)  -- cnn2 1x1 grouped-conv weights (cnn1 weights are ones)
    biases  : (C, K)  -- cnn1 biases (= -knot_k)
    """
    knots = np.linspace(0.0, 1.0, hidden_channels + 1) ** 2
    weights = np.zeros(hidden_channels)
    for i in range(hidden_channels):
        weights[i] = ((knots[i + 1] ** gamma - knots[i] ** gamma)
                      / (knots[i + 1] - knots[i])) - np.sum(weights)
    weights2 = np.tile(weights, (input_channels, 1)).astype(np.float32)           # (C, K)
    biases = (np.concatenate([knots[:-1]] * input_channels) * -1.0).astype(np.float32)
    biases = biases.reshape(input_channels, hidden_channels)                       # (C, K)
    return weights2, biases


# ----------------------------------------------------------------------------
# Host-side analysis of the piecewise-linear function
# ----------------------------------------------------------------------------
def _line_form(w_row, b_row):
    """Cumulative line coefficients of f(x)=sum_k w_k*relu(x + b_k) and whether
    f is concave (min-of-lines), convex (max-of-lines), or neither."""
    w = np.asarray(w_row, np.float64)
    knots = -np.asarray(b_row, np.float64)
    coef_a = np.cumsum(w)                     # segment slopes
    coef_b = -np.cumsum(w * knots)            # segment intercepts
    dw = w[1:]
    if np.all(dw <= 1e-12):
        mode = "min"        # decreasing slopes (gamma <= 1): concave
    elif np.all(dw >= -1e-12):
        mode = "max"        # increasing slopes (gamma >= 1): convex
    else:
        mode = "relu_sum"   # mixed signs: keep the general form
    return (mode,
            tuple(float(v) for v in coef_a),
            tuple(float(v) for v in coef_b))


# ----------------------------------------------------------------------------
# Pallas kernel (channel-uniform parameters baked in as compile-time constants)
# ----------------------------------------------------------------------------
def _gamma_uniform_kernel(x_ref, o_ref, *, mode, coef_a, coef_b, w_k, b_k):
    """out = relu(f(x)) elementwise on a (rows_tile, lanes) VMEM block.

    mode == "min"/"max": f(x) = min_k / max_k (A_k*x + B_k)  (concave / convex)
    mode == "relu_sum" : f(x) = sum_k w_k * relu(x + b_k)     (general)
    """
    # f32 compute: matches PyTorch fp32 conv accumulation and avoids the
    # missing bf16 VALU path on v5e.  Store back in the input dtype.
    x = x_ref[...].astype(jnp.float32)
    if mode == "relu_sum":
        acc = None
        for w, b in zip(w_k, b_k):
            t = jnp.maximum(x + b if b != 0.0 else x, 0.0) * w
            acc = t if acc is None else acc + t
    else:
        sel = jnp.minimum if mode == "min" else jnp.maximum
        acc = None
        for a, b in zip(coef_a, coef_b):
            line = a * x + b if b != 0.0 else a * x     # b_0 == 0 folds away
            acc = line if acc is None else sel(acc, line)
    o_ref[...] = jnp.maximum(acc, 0.0).astype(o_ref.dtype)


# ----------------------------------------------------------------------------
# Layout chooser: lane-dense, sublane-rich, >= 2 grid steps when possible
# ----------------------------------------------------------------------------
def _pick_lanes(total: int) -> int:
    """`total` is a multiple of 128.  Prefer sublane-rich rows (>=8, multiple
    of 8) and a lane-dense (wide multiple of 128) last dimension."""
    cands = [l for l in (1024, 512, 256, 128) if total % l == 0]
    for want_rows, want_mult8 in ((64, True), (8, True), (8, False)):
        for l in cands:                               # widest first
            r = total // l
            if r >= want_rows and (not want_mult8 or r % 8 == 0):
                return l
    return 128


def _pick_row_tile(rows: int, lanes: int, itemsize: int,
                   target_block_bytes: int) -> int:
    if rows <= 8:
        return rows                                   # single tiny block (full dim)
    cap = max(8, ((target_block_bytes // (lanes * itemsize)) // 8) * 8)
    want_steps = 4 if rows >= 32 else 2               # pipelining + v7x megacore
    steps_cap = max(8, ((rows // want_steps) // 8) * 8)
    full_cap = max(8, (rows // 8) * 8)
    return min(cap, steps_cap, full_cap)


# ----------------------------------------------------------------------------
# Forward pass
# ----------------------------------------------------------------------------
def _gamma_forward_uniform(x, w_row, b_row, *, target_block_bytes: int = 2 << 20):
    """Channel-uniform fast path: elementwise over the whole flattened tensor."""
    orig_shape = x.shape
    total = int(np.prod(orig_shape))

    lane_pad = (-total) % 128
    x_flat = x.reshape(-1)                            # free reshape, no transpose
    if lane_pad:
        # TODO(synk): an in-kernel masked tail would avoid this HBM pad copy;
        # only reached when N*C*H*W is not a multiple of 128.
        x_flat = jnp.pad(x_flat, (0, lane_pad))
    padded = total + lane_pad

    lanes = _pick_lanes(padded)
    rows = padded // lanes
    rt = _pick_row_tile(rows, lanes, x.dtype.itemsize, target_block_bytes)
    num_tiles = pl.cdiv(rows, rt)
    x2d = x_flat.reshape(rows, lanes)

    mode, coef_a, coef_b = _line_form(w_row, b_row)
    kernel = functools.partial(
        _gamma_uniform_kernel, mode=mode, coef_a=coef_a, coef_b=coef_b,
        w_k=tuple(float(v) for v in np.asarray(w_row)),
        b_k=tuple(float(v) for v in np.asarray(b_row)))

    out2d = pl.pallas_call(
        kernel,
        out_shape=jax.ShapeDtypeStruct((rows, lanes), x.dtype),
        grid=(num_tiles,),
        in_specs=[pl.BlockSpec((rt, lanes), lambda i: (i, 0))],
        out_specs=pl.BlockSpec((rt, lanes), lambda i: (i, 0)),
        compiler_params=pltpu.CompilerParams(
            dimension_semantics=("parallel",),
            vmem_limit_bytes=32 * 1024 * 1024),
    )(x2d)

    out_flat = out2d.reshape(-1)
    if lane_pad:
        out_flat = out_flat[:total]
    return out_flat.reshape(orig_shape)


def gamma_cnn_forward(x_nchw: jax.Array, weights2, biases,
                      *, target_block_bytes: int = 2 << 20) -> jax.Array:
    """Forward pass of gamma_cnn. x_nchw: (N, C, H, W) -> (N, C, H, W)."""
    w_np = np.asarray(weights2)
    b_np = np.asarray(biases)
    uniform = (w_np.shape[0] == 1
               or (np.all(w_np == w_np[:1]) and np.all(b_np == b_np[:1])))
    if uniform:
        # make_cnn_gamma always tiles the SAME K parameters over channels, so
        # the channel axis carries no information -> flatten everything.
        return _gamma_forward_uniform(x_nchw, w_np[0], b_np[0],
                                      target_block_bytes=target_block_bytes)
    # General per-channel parameters (never produced by the module itself):
    # run the same constant-folded kernel once per channel.
    # TODO(synk): a single SMEM-table kernel would avoid the per-channel slices.
    outs = [_gamma_forward_uniform(x_nchw[:, c:c + 1], w_np[c], b_np[c],
                                   target_block_bytes=target_block_bytes)
            for c in range(w_np.shape[0])]
    return jnp.concatenate(outs, axis=1)


# ----------------------------------------------------------------------------
# Reference (plain JAX) — same math as the PyTorch module, for correctness.
# ----------------------------------------------------------------------------
def gamma_cnn_reference(x_nchw, weights2, biases):
    x = x_nchw[:, :, None, :, :]                               # (N, C, 1, H, W)
    b = jnp.asarray(biases)[None, :, :, None, None]            # (1, C, K, 1, 1)
    w = jnp.asarray(weights2)[None, :, :, None, None]          # (1, C, K, 1, 1)
    hidden = jnp.maximum(x + b, 0.0)
    return jnp.maximum(jnp.sum(w * hidden, axis=2), 0.0)       # (N, C, H, W)


if __name__ == "__main__":
    gamma = 0.5
    hidden_channels = 8
    key = jax.random.PRNGKey(0)
    k1, k2, k3 = jax.random.split(key, 3)

    # --- Primary: exact module hyper-parameters (in_chans=1), NCHW input.
    in_chans = 1
    w_np, b_np = make_cnn_gamma(hidden_channels, in_chans, gamma)
    x = jax.random.uniform(k1, (2, in_chans, 16, 16), dtype=jnp.float32)
    out = jax.block_until_ready(gamma_cnn_forward(x, w_np, b_np))
    np.testing.assert_allclose(np.asarray(out),
                               np.asarray(gamma_cnn_reference(x, w_np, b_np)),
                               rtol=1e-5, atol=1e-5)

    # --- Multi-channel + bigger spatial (exercises the row-tiled grid, 3 steps).
    in_chans2 = 3
    w2_np, b2_np = make_cnn_gamma(hidden_channels, in_chans2, gamma)
    x2 = jax.random.uniform(k2, (2, in_chans2, 32, 32), dtype=jnp.float32)
    out2 = jax.block_until_ready(gamma_cnn_forward(x2, w2_np, b2_np))
    np.testing.assert_allclose(np.asarray(out2),
                               np.asarray(gamma_cnn_reference(x2, w2_np, b2_np)),
                               rtol=1e-5, atol=1e-5)

    # --- Ragged spatial size (exercises the lane-padding path).
    x3 = jax.random.uniform(k3, (1, in_chans, 20, 20), dtype=jnp.float32)
    out3 = jax.block_until_ready(gamma_cnn_forward(x3, w_np, b_np))
    np.testing.assert_allclose(np.asarray(out3),
                               np.asarray(gamma_cnn_reference(x3, w_np, b_np)),
                               rtol=1e-5, atol=1e-5)

    # --- gamma > 1 (convex / max-of-lines branch).
    w4_np, b4_np = make_cnn_gamma(hidden_channels, in_chans, 2.0)
    out4 = jax.block_until_ready(gamma_cnn_forward(x, w4_np, b4_np))
    np.testing.assert_allclose(np.asarray(out4),
                               np.asarray(gamma_cnn_reference(x, w4_np, b4_np)),
                               rtol=1e-5, atol=1e-5)

    # --- bf16 input: loads/stores in bf16, accumulates in f32 inside the kernel.
    xb = x.astype(jnp.bfloat16)
    outb = jax.block_until_ready(gamma_cnn_forward(xb, w_np, b_np))
    np.testing.assert_allclose(np.asarray(outb, dtype=np.float32),
                               np.asarray(gamma_cnn_reference(
                                   xb.astype(jnp.float32), w_np, b_np)),
                               rtol=2e-2, atol=2e-2)

    print("KERNEL_OK")
</pallas_src>

<mosaic_0001>
module attributes {stable_mosaic.version = 11 : i64} {
  func.func @_gamma_uniform_kernel(%arg0: i32, %arg1: memref<4x128xf32, #tpu.memory_space<vmem>>, %arg2: memref<4x128xf32, #tpu.memory_space<vmem>>) attributes {dimension_semantics = [#tpu.dimension_semantics<parallel>], iteration_bounds = array<i64: 1>, scalar_prefetch = 0 : i64, scratch_operands = 0 : i64, tpu.core_type = #tpu.core_type<tc>, window_params = [{transform_indices = @transform_0, window_bounds = array<i64: 4, 128>}, {transform_indices = @transform_1, window_bounds = array<i64: 4, 128>}]} {
    %c0 = arith.constant 0 : index
    %c0_0 = arith.constant 0 : index
    %0 = vector.load %arg1[%c0, %c0_0] : memref<4x128xf32, #tpu.memory_space<vmem>>, vector<4x128xf32>
    %cst = arith.constant 8.000000e+00 : f32
    %1 = vector.broadcast %cst : f32 to vector<4x128xf32>
    %2 = arith.mulf %1, %0 : vector<4x128xf32>
    %cst_1 = arith.constant 2.66666651 : f32
    %3 = vector.broadcast %cst_1 : f32 to vector<4x128xf32>
    %4 = arith.mulf %3, %0 : vector<4x128xf32>
    %cst_2 = arith.constant 0.0833333358 : f32
    %5 = vector.broadcast %cst_2 : f32 to vector<4x128xf32>
    %6 = arith.addf %4, %5 : vector<4x128xf32>
    %7 = arith.minimumf %2, %6 : vector<4x128xf32>
    %cst_3 = arith.constant 1.59999979 : f32
    %8 = vector.broadcast %cst_3 : f32 to vector<4x128xf32>
    %9 = arith.mulf %8, %0 : vector<4x128xf32>
    %cst_4 = arith.constant 1.500000e-01 : f32
    %10 = vector.broadcast %cst_4 : f32 to vector<4x128xf32>
    %11 = arith.addf %9, %10 : vector<4x128xf32>
    %12 = arith.minimumf %7, %11 : vector<4x128xf32>
    %cst_5 = arith.constant 1.14285696 : f32
    %13 = vector.broadcast %cst_5 : f32 to vector<4x128xf32>
    %14 = arith.mulf %13, %0 : vector<4x128xf32>
    %cst_6 = arith.constant 0.214285716 : f32
    %15 = vector.broadcast %cst_6 : f32 to vector<4x128xf32>
    %16 = arith.addf %14, %15 : vector<4x128xf32>
    %17 = arith.minimumf %12, %16 : vector<4x128xf32>
    %cst_7 = arith.constant 0.888888657 : f32
    %18 = vector.broadcast %cst_7 : f32 to vector<4x128xf32>
    %19 = arith.mulf %18, %0 : vector<4x128xf32>
    %cst_8 = arith.constant 0.277777791 : f32
    %20 = vector.broadcast %cst_8 : f32 to vector<4x128xf32>
    %21 = arith.addf %19, %20 : vector<4x128xf32>
    %22 = arith.minimumf %17, %21 : vector<4x128xf32>
    %cst_9 = arith.constant 0.72727251 : f32
    %23 = vector.broadcast %cst_9 : f32 to vector<4x128xf32>
    %24 = arith.mulf %23, %0 : vector<4x128xf32>
    %cst_10 = arith.constant 0.340909094 : f32
    %25 = vector.broadcast %cst_10 : f32 to vector<4x128xf32>
    %26 = arith.addf %24, %25 : vector<4x128xf32>
    %27 = arith.minimumf %22, %26 : vector<4x128xf32>
    %cst_11 = arith.constant 0.615384399 : f32
    %28 = vector.broadcast %cst_11 : f32 to vector<4x128xf32>
    %29 = arith.mulf %28, %0 : vector<4x128xf32>
    %cst_12 = arith.constant 0.403846174 : f32
    %30 = vector.broadcast %cst_12 : f32 to vector<4x128xf32>
    %31 = arith.addf %29, %30 : vector<4x128xf32>
    %32 = arith.minimumf %27, %31 : vector<4x128xf32>
    %cst_13 = arith.constant 0.533333123 : f32
    %33 = vector.broadcast %cst_13 : f32 to vector<4x128xf32>
    %34 = arith.mulf %33, %0 : vector<4x128xf32>
    %cst_14 = arith.constant 0.466666669 : f32
    %35 = vector.broadcast %cst_14 : f32 to vector<4x128xf32>
    %36 = arith.addf %34, %35 : vector<4x128xf32>
    %37 = arith.minimumf %32, %36 : vector<4x128xf32>
    %cst_15 = arith.constant 0.000000e+00 : f32
    %38 = vector.broadcast %cst_15 : f32 to vector<4x128xf32>
    %39 = arith.maximumf %37, %38 : vector<4x128xf32>
    %c0_16 = arith.constant 0 : index
    %c0_17 = arith.constant 0 : index
    %40 = vector.load %arg2[%c0_16, %c0_17] : memref<4x128xf32, #tpu.memory_space<vmem>>, vector<4x128xf32>
    tpu.vector_store %arg2[%c0_16, %c0_17], %39 {strides = array<i32>} : memref<4x128xf32, #tpu.memory_space<vmem>>, vector<4x128xf32>,
    return
  }
  func.func @transform_0(%arg0: i32) -> (i32, i32) {
    %c0_i32 = arith.constant 0 : i32
    %c0_i32_0 = arith.constant 0 : i32
    return %arg0, %c0_i32 : i32, i32
  }
  func.func @transform_1(%arg0: i32) -> (i32, i32) {
    %c0_i32 = arith.constant 0 : i32
    %c0_i32_0 = arith.constant 0 : i32
    return %arg0, %c0_i32 : i32, i32
  }
}

</mosaic_0001>

<llo_original>
// kernel: tpu_custom_call.1
$region0: #{tpu_custom_call.1}
  #allocation0 [shape = 'u32[]', space=smem, size = 0x4, offset = 0x4, fixed_abs, tag = 'smem constant byte address 0x4 - core index']
  #allocation1 [shape = 'u32[144,128]{1,0:T(1,128)}', space=vmem, size = 0x12000, scoped, tag = 'internal scratch']
  %s0 = inlined_call_operand.hbm [shape: f32[4,128], index: 0, kind: input, shape index: {}]
  %s1 = inlined_call_operand.hbm [shape: f32[4,128], index: 1, kind: output, shape index: {}]
  %s2 = sld [smem:[#allocation0]]
  $region18: #{tpu_custom_call.1} parent=0
    _
  %s4 = ssub.s32 1, %s2
  %s5 = scalar_select 0, %s4, %s2
  $region1: #{tpu_custom_call.1} parent=0
    #allocation2 [shape = 'u8[2048]{0}', space=vmem, size = 0x800, scoped, tag = 'input window, operand 0, single buffered']
    #allocation3 [shape = 's32[1]{0}', space=sflag, size = 0x4, scoped, tag = 'scoped memory for tpu_custom_call.1']
    #allocation4 [shape = 's32[1]{0}', space=sflag, size = 0x4, scoped, tag = 'scoped memory for tpu_custom_call.1']
    #allocation5 [shape = 'u8[2048]{0}', space=vmem, size = 0x800, scoped, tag = 'output window, operand 0, single buffered']
    %6 = vsyncpa [#allocation3], 0
    %7 = vsyncpa [#allocation4], 0
    // Predicated region
    $region2: #{tpu_custom_call.1} parent=1 // pred_check
      _
    $region3: #{tpu_custom_call.1} parent=1 // pred_check_branch
      %9 = sbr.rel (0) target = $region5
    $region4: #{tpu_custom_call.1} parent=1 // pred_region
      %s11 = ssub.s32 64, 64
      %12 = vsyncadd [#allocation3], %s11
      %s14 = sshll.u32 [#allocation2], 4
      %s15 = int_to_ptr.vmem [resolvable:$true] %s14
      %17 = dma.hbm_to_vmem [thread:$0]  %s0, 64, %s15, [#allocation3]
    $region5: #{tpu_custom_call.1} parent=1 // pred_fallthru
      _
    // Predicated region
    $region6: #{tpu_custom_call.1} parent=1 // pred_check
      _
    $region7: #{tpu_custom_call.1} parent=1 // pred_check_branch
      %19 = sbr.rel (0) target = $region9
    $region8: #{tpu_custom_call.1} parent=1 // pred_region
      %20 = dma.done [#allocation3], 64
    $region9: #{tpu_custom_call.1} parent=1 // pred_fallthru
      _
    %v21 = vld [vmem:[#allocation2] sm:$0xf]
    %v22 = vmul.f32 %v21, 8.0
    %v23 = vmul.f32 %v21, 2.6666665
    %v24 = vadd.f32 %v23, 0.083333336
    %v25 = vmin.f32 %v22, %v24
    %v26 = vmul.f32 %v21, 1.5999998
    %v27 = vadd.f32 %v26, 0.15
    %v28 = vmin.f32 %v25, %v27
    %v29 = vmul.f32 %v21, 1.142857
    %v30 = vadd.f32 %v29, 0.21428572
    %v31 = vmin.f32 %v28, %v30
    %v32 = vmul.f32 %v21, 0.88888866
    %v33 = vadd.f32 %v32, 0.2777778
    %v34 = vmin.f32 %v31, %v33
    %v35 = vmul.f32 %v21, 0.7272725
    %v36 = vadd.f32 %v35, 0.3409091
    %v37 = vmin.f32 %v34, %v36
    %v38 = vmul.f32 %v21, 0.6153844
    %v39 = vadd.f32 %v38, 0.40384617
    %v40 = vmin.f32 %v37, %v39
    %v41 = vmul.f32 %v21, 0.5333331
    %v42 = vadd.f32 %v41, 0.46666667
    %v43 = vmin.f32 %v40, %v42
    %v44 = vmax.f32 %v43, 0.0
    %45 = vst [vmem:[#allocation5] sm:$0xf] %v44
    // Predicated region
    $region10: #{tpu_custom_call.1} parent=1 // pred_check
      _
    $region11: #{tpu_custom_call.1} parent=1 // pred_check_branch
      %47 = sbr.rel (0) target = $region13
    $region12: #{tpu_custom_call.1} parent=1 // pred_region
      %s49 = ssub.s32 64, 64
      %50 = vsyncadd [#allocation4], %s49
      %s52 = sshll.u32 [#allocation5], 4
      %s53 = int_to_ptr.vmem [resolvable:$true] %s52
      %55 = dma.vmem_to_hbm [thread:$0]  %s53, 64, %s1, [#allocation4]
    $region13: #{tpu_custom_call.1} parent=1 // pred_fallthru
      _
    // Predicated region
    $region14: #{tpu_custom_call.1} parent=1 // pred_check
      _
    $region15: #{tpu_custom_call.1} parent=1 // pred_check_branch
      %57 = sbr.rel (0) target = $region17
    $region16: #{tpu_custom_call.1} parent=1 // pred_region
      %58 = dma.done [#allocation4], 64
    $region17: #{tpu_custom_call.1} parent=1 // pred_fallthru
      _
    %59 = vsyncpa [#allocation3], 1
    %60 = vsyncpa [#allocation4], 1

</llo_original>
